<compile_context>
chip_gen: v5e
topology: v5e:2x2
jax: 0.10.0
libtpu: 0.0.40
codegen_flags: <defaults>
</compile_context>

<pallas_src>
import functools

import jax
import jax.numpy as jnp
from jax import lax
from jax.experimental import pallas as pl
from jax.experimental.pallas import tpu as pltpu


def _round_up(x, m):
    return ((x + m - 1) // m) * m


def _rbf_kernel(x_ref, y_ref, xxn_ref, yyn_ref, o_ref, *acc,
                gamma, bf16_mma, n_k):
    """One (tm, tn) output tile; optionally accumulated over n_k K-tiles."""
    two_gamma = 2.0 * gamma

    # (2*gamma) * X tile, contraction on the last dim of both operands
    # (no explicit transpose of y; MXU consumes the RHS natively).
    x = x_ref[...].astype(jnp.float32) * two_gamma          # (tm, tk)
    y = y_ref[...].astype(jnp.float32)                      # (tn, tk)
    if bf16_mma:
        x = x.astype(jnp.bfloat16)
        y = y.astype(jnp.bfloat16)
    xy_part = lax.dot_general(
        x, y, (((1,), (1,)), ((), ())),
        preferred_element_type=jnp.float32)                  # (tm, tn)

    def finalize(xy):
        # exp(-gamma*dnorm2) == exp(2*gamma*XY - gamma*||x||^2 - gamma*||y||^2)
        return jnp.exp(xy + xxn_ref[...] + yyn_ref[...]).astype(o_ref.dtype)

    if n_k == 1:
        # Common small-D case: no accumulator round-trip at all.
        o_ref[...] = finalize(xy_part)
    else:
        acc_ref = acc[0]
        k = pl.program_id(2)

        @pl.when(k == 0)
        def _():
            acc_ref[...] = xy_part

        @pl.when(k != 0)
        def _():
            acc_ref[...] += xy_part

        @pl.when(k == pl.num_programs(2) - 1)
        def _():
            o_ref[...] = finalize(acc_ref[...])


def rbf(X, Y, n, sigma=None, *, tm_max=512, tn_max=2048, tk_max=512,
        use_bf16_matmul=None, out_dtype=jnp.float32):
    """Pallas TPU forward of the RBF module. X: (N, D), Y: (M, D) -> (N, M).

    use_bf16_matmul: None -> auto (bf16 MXU operands when D >= 512);
                     explicit True/False overrides.
    out_dtype: opt-in jnp.bfloat16 halves output writeback on v6e/v7x
               (keep f32 on v5e / for tight tolerances).
    """
    N, D = X.shape
    M, Dy = Y.shape
    assert D == Dy, "feature dims must match"

    if sigma is None:
        sigma_val = 10.0 ** int(1 - n)
    else:
        sigma_val = float(sigma)
    gamma = 1.0 / (1e-08 + 2.0 * sigma_val ** 2)

    if use_bf16_matmul is None:
        use_bf16_matmul = D >= 512   # only when the matmul can dominate

    # Precompute the (cheap, O(N*D)) row norms once with XLA; the kernel just
    # streams them as (tm,1)/(1,tn) bias tiles instead of recomputing them
    # M/tn (resp. once) times per grid step.
    Xf = X.astype(jnp.float32)
    Yf = Y.astype(jnp.float32)
    xx_neg = (-gamma) * jnp.sum(Xf * Xf, axis=-1, keepdims=True)        # (N, 1)
    yy_neg = ((-gamma) * jnp.sum(Yf * Yf, axis=-1, keepdims=True)).T    # (1, M)

    # --- Contraction (D) tiling: bounded VMEM for any feature dim. ---------
    if D <= tk_max:
        tk, n_k = D, 1                      # full-dim escape of the 128 rule
        Xk, Yk = X, Y
    else:
        Dp = _round_up(D, 128)
        if Dp != D:
            # Zero padding leaves dot products and norms exactly unchanged.
            Xk = jnp.pad(X, ((0, 0), (0, Dp - D)))
            Yk = jnp.pad(Y, ((0, 0), (0, Dp - D)))
        else:
            Xk, Yk = X, Y
        tk = next(t for t in (512, 256, 128) if Dp % t == 0)
        n_k = Dp // tk

    # --- Spatial tiling: full-array blocks for small problems, else 8-/128-
    # aligned tiles. tn covers all of M up to 2048 so Y stays VMEM-resident
    # for the whole grid (no re-streaming from HBM). ------------------------
    tm = N if N <= tm_max else tm_max       # tm_max % 8 == 0
    tn = M if M <= tn_max else tn_max       # tn_max % 128 == 0
    gi, gj = pl.cdiv(N, tm), pl.cdiv(M, tn)
    # v7x megacore: don't leave one TensorCore idle on a (1,1) spatial grid.
    if gi == 1 and gj == 1:
        if N >= 16:
            tm = _round_up((N + 1) // 2, 8)
        elif M >= 256:
            tn = _round_up((M + 1) // 2, 128)
        gi, gj = pl.cdiv(N, tm), pl.cdiv(M, tn)

    # --- VMEM limit from the actual footprint (+ headroom), never 64 MiB. --
    out_bytes = jnp.dtype(out_dtype).itemsize
    in_bytes = jnp.dtype(Xk.dtype).itemsize
    footprint = (2 * (tm * tk + tn * tk) * in_bytes        # double-buffered X/Y
                 + 2 * (tm + tn) * 4                       # norm vectors
                 + 2 * tm * tn * out_bytes                 # double-buffered out
                 + (tm * tn * 4 if n_k > 1 else 0))        # accumulator scratch
    vmem_limit = min(max(footprint + (16 << 20), 32 << 20), 96 << 20)

    kernel = functools.partial(_rbf_kernel, gamma=float(gamma),
                               bf16_mma=bool(use_bf16_matmul), n_k=n_k)
    scratch = [pltpu.VMEM((tm, tn), jnp.float32)] if n_k > 1 else []

    return pl.pallas_call(
        kernel,
        out_shape=jax.ShapeDtypeStruct((N, M), out_dtype),
        grid_spec=pltpu.PrefetchScalarGridSpec(
            num_scalar_prefetch=0,
            grid=(gi, gj, n_k),                 # k innermost, X resident over j
            in_specs=[
                pl.BlockSpec((tm, tk), lambda i, j, k: (i, k)),
                pl.BlockSpec((tn, tk), lambda i, j, k: (j, k)),
                pl.BlockSpec((tm, 1), lambda i, j, k: (i, 0)),
                pl.BlockSpec((1, tn), lambda i, j, k: (0, j)),
            ],
            out_specs=pl.BlockSpec((tm, tn), lambda i, j, k: (i, j)),
            scratch_shapes=scratch,
        ),
        compiler_params=pltpu.CompilerParams(
            dimension_semantics=("parallel", "parallel", "arbitrary"),
            vmem_limit_bytes=int(vmem_limit),
        ),
    )(Xk, Yk, xx_neg, yy_neg)


def _rbf_ref(X, Y, n, sigma=None):
    """Pure-JAX reference mirroring the PyTorch module."""
    XX = X @ X.T
    XY = X @ Y.T
    YY = Y @ Y.T
    dnorm2 = -2.0 * XY + jnp.diag(XX)[:, None] + jnp.diag(YY)[None, :]
    if sigma is None:
        sigma = 10.0 ** int(1 - n)
    gamma = 1.0 / (1e-08 + 2.0 * sigma ** 2)
    return jnp.exp(-gamma * dnorm2)


if __name__ == "__main__":
    key = jax.random.PRNGKey(0)
    kx, ky, kx2, ky2, kx3, ky3 = jax.random.split(key, 6)

    # --- Test 1: small shapes matching the module's toy use (single block). -
    N, M, D = 8, 8, 32
    n_param = 2  # RBF(n=2) -> sigma = 10**(1-2) = 0.1
    X = jax.random.normal(kx, (N, D), dtype=jnp.float32)
    Y = jax.random.normal(ky, (M, D), dtype=jnp.float32)
    K = jax.block_until_ready(rbf(X, Y, n=n_param, sigma=None))
    K_ref = _rbf_ref(X, Y, n=n_param, sigma=None)
    assert K.shape == (N, M)
    assert jnp.allclose(K, K_ref, atol=1e-5, rtol=1e-4), "mismatch (small)"

    # --- Test 2: spatially tiled path with a partial edge tile on the M axis.
    N2, M2, D2 = 256, 2304, 64
    sigma2 = 8.0
    X2 = jax.random.normal(kx2, (N2, D2), dtype=jnp.float32)
    Y2 = jax.random.normal(ky2, (M2, D2), dtype=jnp.float32)
    K2 = jax.block_until_ready(rbf(X2, Y2, n=1, sigma=sigma2))
    K2_ref = _rbf_ref(X2, Y2, n=1, sigma=sigma2)
    assert K2.shape == (N2, M2)
    assert jnp.allclose(K2, K2_ref, atol=1e-5, rtol=1e-4), "mismatch (tiled)"

    # --- Test 3: K-tiled path (D > 512) + megacore split, f32 MXU operands. -
    N3, M3, D3 = 64, 128, 768
    sigma3 = 32.0
    X3 = jax.random.normal(kx3, (N3, D3), dtype=jnp.float32)
    Y3 = jax.random.normal(ky3, (M3, D3), dtype=jnp.float32)
    K3 = jax.block_until_ready(rbf(X3, Y3, n=1, sigma=sigma3,
                                   use_bf16_matmul=False))
    K3_ref = _rbf_ref(X3, Y3, n=1, sigma=sigma3)
    assert K3.shape == (N3, M3)
    assert jnp.allclose(K3, K3_ref, atol=1e-5, rtol=1e-4), "mismatch (k-tiled)"

    # Same shapes with the auto bf16-operand matmul (relaxed tolerance).
    K3b = jax.block_until_ready(rbf(X3, Y3, n=1, sigma=sigma3))
    assert jnp.allclose(K3b, K3_ref, atol=5e-3), "mismatch (bf16 mma)"

    print("KERNEL_OK")
</pallas_src>

<mosaic_0001>
module attributes {stable_mosaic.version = 11 : i64} {
  func.func @_rbf_kernel(%arg0: i32, %arg1: i32, %arg2: i32, %arg3: memref<8x32xf32, #tpu.memory_space<vmem>>, %arg4: memref<8x32xf32, #tpu.memory_space<vmem>>, %arg5: memref<8x1xf32, #tpu.memory_space<vmem>>, %arg6: memref<1x8xf32, #tpu.memory_space<vmem>>, %arg7: memref<8x8xf32, #tpu.memory_space<vmem>>) attributes {dimension_semantics = [#tpu.dimension_semantics<parallel>, #tpu.dimension_semantics<parallel>, #tpu.dimension_semantics<arbitrary>], iteration_bounds = array<i64: 1, 1, 1>, scalar_prefetch = 0 : i64, scratch_operands = 0 : i64, tpu.core_type = #tpu.core_type<tc>, window_params = [{transform_indices = @transform_0, window_bounds = array<i64: 8, 32>}, {transform_indices = @transform_1, window_bounds = array<i64: 8, 32>}, {transform_indices = @transform_2, window_bounds = array<i64: 8, 1>}, {transform_indices = @transform_3, window_bounds = array<i64: 1, 8>}, {transform_indices = @transform_4, window_bounds = array<i64: 8, 8>}]} {
    %c0 = arith.constant 0 : index
    %c0_0 = arith.constant 0 : index
    %0 = vector.load %arg3[%c0, %c0_0] : memref<8x32xf32, #tpu.memory_space<vmem>>, vector<8x32xf32>
    %cst = arith.constant 99.9999465 : f32
    %1 = vector.broadcast %cst : f32 to vector<8x32xf32>
    %2 = arith.mulf %0, %1 : vector<8x32xf32>
    %c0_1 = arith.constant 0 : index
    %c0_2 = arith.constant 0 : index
    %3 = vector.load %arg4[%c0_1, %c0_2] : memref<8x32xf32, #tpu.memory_space<vmem>>, vector<8x32xf32>
    %cst_3 = arith.constant dense<0.000000e+00> : vector<8x8xf32>
    %4 = tpu.matmul %2, %3, %cst_3 {dimension_numbers = #tpu.dot_dimension_numbers<[1], [1], [0], [0], [0, 0, 1, 0], [], []>} : vector<8x32xf32>, vector<8x32xf32>, vector<8x8xf32> -> vector<8x8xf32>
    %c0_4 = arith.constant 0 : index
    %c0_5 = arith.constant 0 : index
    %5 = vector.load %arg5[%c0_4, %c0_5] : memref<8x1xf32, #tpu.memory_space<vmem>>, vector<8x1xf32>
    %6 = vector.broadcast %5 : vector<8x1xf32> to vector<8x8xf32>
    %7 = arith.addf %4, %6 : vector<8x8xf32>
    %c0_6 = arith.constant 0 : index
    %c0_7 = arith.constant 0 : index
    %8 = vector.load %arg6[%c0_6, %c0_7] : memref<1x8xf32, #tpu.memory_space<vmem>>, vector<1x8xf32>
    %9 = vector.broadcast %8 : vector<1x8xf32> to vector<8x8xf32>
    %10 = arith.addf %7, %9 : vector<8x8xf32>
    %11 = math.exp %10 : vector<8x8xf32>
    %c0_8 = arith.constant 0 : index
    %c0_9 = arith.constant 0 : index
    %12 = vector.load %arg7[%c0_8, %c0_9] : memref<8x8xf32, #tpu.memory_space<vmem>>, vector<8x8xf32>
    tpu.vector_store %arg7[%c0_8, %c0_9], %11 {strides = array<i32>} : memref<8x8xf32, #tpu.memory_space<vmem>>, vector<8x8xf32>,
    return
  }
  func.func @transform_0(%arg0: i32, %arg1: i32, %arg2: i32) -> (i32, i32) {
    %c0_i32 = arith.constant 0 : i32
    return %arg0, %arg2 : i32, i32
  }
  func.func @transform_1(%arg0: i32, %arg1: i32, %arg2: i32) -> (i32, i32) {
    %c0_i32 = arith.constant 0 : i32
    return %arg1, %arg2 : i32, i32
  }
  func.func @transform_2(%arg0: i32, %arg1: i32, %arg2: i32) -> (i32, i32) {
    %c0_i32 = arith.constant 0 : i32
    %c0_i32_0 = arith.constant 0 : i32
    return %arg0, %c0_i32 : i32, i32
  }
  func.func @transform_3(%arg0: i32, %arg1: i32, %arg2: i32) -> (i32, i32) {
    %c0_i32 = arith.constant 0 : i32
    %c0_i32_0 = arith.constant 0 : i32
    return %c0_i32, %arg1 : i32, i32
  }
  func.func @transform_4(%arg0: i32, %arg1: i32, %arg2: i32) -> (i32, i32) {
    %c0_i32 = arith.constant 0 : i32
    return %arg0, %arg1 : i32, i32
  }
}

</mosaic_0001>

<llo_original>
// kernel: tpu_custom_call.1
$region0: #{tpu_custom_call.1}
  #allocation0 [shape = 'u32[]', space=smem, size = 0x4, offset = 0x4, fixed_abs, tag = 'smem constant byte address 0x4 - core index']
  #allocation1 [shape = 'u32[72,128]{1,0:T(1,128)}', space=vmem, size = 0x9000, scoped, tag = 'internal scratch']
  %s0 = inlined_call_operand.vmem [shape: f32[8,32], index: 0, kind: input, shape index: {}]
  %s1 = inlined_call_operand.hbm [shape: f32[8,32], index: 1, kind: input, shape index: {}]
  %s2 = inlined_call_operand.vmem [shape: f32[8,1], index: 2, kind: input, shape index: {}]
  %s3 = inlined_call_operand.vmem [shape: f32[1,8], index: 3, kind: input, shape index: {}]
  %s4 = inlined_call_operand.hbm [shape: f32[8,8], index: 4, kind: output, shape index: {}]
  %s5 = sld [smem:[#allocation0]]
  $region30: #{tpu_custom_call.1} parent=0
    _
  %s7 = ssub.s32 1, %s5
  %s8 = scalar_select 0, %s7, %s5
  $region1: #{tpu_custom_call.1} parent=0
    #allocation2 [shape = 'u8[4096]{0}', space=vmem, size = 0x1000, scoped, tag = 'input window, operand 1, single buffered']
    #allocation3 [shape = 's32[1]{0}', space=sflag, size = 0x4, scoped, tag = 'scoped memory for tpu_custom_call.1']
    #allocation4 [shape = 's32[1]{0}', space=sflag, size = 0x4, scoped, tag = 'scoped memory for tpu_custom_call.1']
    #allocation5 [shape = 'u8[4096]{0}', space=vmem, size = 0x1000, scoped, tag = 'output window, operand 0, single buffered']
    %9 = vsyncpa [#allocation3], 0
    %10 = vsyncpa [#allocation4], 0
    // Predicated region
    $region2: #{tpu_custom_call.1} parent=1 // pred_check
      _
    $region3: #{tpu_custom_call.1} parent=1 // pred_check_branch
      %12 = sbr.rel (0) target = $region5
    $region4: #{tpu_custom_call.1} parent=1 // pred_region
      _
    $region5: #{tpu_custom_call.1} parent=1 // pred_fallthru
      _
    // Predicated region
    $region6: #{tpu_custom_call.1} parent=1 // pred_check
      _
    $region7: #{tpu_custom_call.1} parent=1 // pred_check_branch
      %14 = sbr.rel (0) target = $region9
    $region8: #{tpu_custom_call.1} parent=1 // pred_region
      %16 = vsyncadd [#allocation3], 0
      %s18 = sshll.u32 %s1, 4
      %s19 = int_to_ptr.hbm [resolvable:$true] %s18
      %s20 = sshll.u32 [#allocation2], 4
      %s21 = int_to_ptr.vmem [resolvable:$true] %s20
      %23 = dma.hbm_to_vmem [thread:$0]  %s19, 128, %s21, [#allocation3]
    $region9: #{tpu_custom_call.1} parent=1 // pred_fallthru
      _
    // Predicated region
    $region10: #{tpu_custom_call.1} parent=1 // pred_check
      _
    $region11: #{tpu_custom_call.1} parent=1 // pred_check_branch
      %25 = sbr.rel (0) target = $region13
    $region12: #{tpu_custom_call.1} parent=1 // pred_region
      _
    $region13: #{tpu_custom_call.1} parent=1 // pred_fallthru
      _
    // Predicated region
    $region14: #{tpu_custom_call.1} parent=1 // pred_check
      _
    $region15: #{tpu_custom_call.1} parent=1 // pred_check_branch
      %27 = sbr.rel (0) target = $region17
    $region16: #{tpu_custom_call.1} parent=1 // pred_region
      _
    $region17: #{tpu_custom_call.1} parent=1 // pred_fallthru
      _
    // Predicated region
    $region18: #{tpu_custom_call.1} parent=1 // pred_check
      _
    $region19: #{tpu_custom_call.1} parent=1 // pred_check_branch
      %29 = sbr.rel (0) target = $region21
    $region20: #{tpu_custom_call.1} parent=1 // pred_region
      %31 = dma.done [#allocation3], 128
    $region21: #{tpu_custom_call.1} parent=1 // pred_fallthru
      _
    %v32 = vld [vmem:[%s0] sm:$0xff]
    %v33 = vmul.f32 %v32, 99.99995
    %v34 = vld [vmem:[#allocation2] sm:$0xff]
    %v35 = vld [vmem:[%s2] sm:$0xff]
    %37 = vset.pattern.permute.xlu0 0
    %38 = vperm.xlu0 %37, %v35
    %v39 = vpop.permute.xlu0 %38
    %vm41 = vcmask 261120
    %v43 = vsel %vm41, %v33, 0
    %v46 = vsel %vm41, %v34, 0
    %48 = vmatpush.xpose.msra.mxu0 0.0
    %49 = vmatpush.xpose.msra.mxu0 0.0
    %50 = vmatpush.xpose.msra.mxu0 0.0
    %51 = vmatpush.xpose.msra.mxu0 0.0
    %52 = vmatpush.xpose.msra.mxu0 0.0
    %53 = vmatpush.xpose.msra.mxu0 0.0
    %54 = vmatpush.xpose.msra.mxu0 0.0
    %55 = vmatpush.xpose.msra.mxu0 0.0
    %56 = vmatpush.xpose.msra.mxu0 0.0
    %57 = vmatpush.xpose.msra.mxu0 0.0
    %58 = vmatpush.xpose.msra.mxu0 0.0
    %59 = vmatpush.xpose.msra.mxu0 0.0
    %60 = vmatpush.xpose.msra.mxu0 0.0
    %61 = vmatpush.xpose.msra.mxu0 0.0
    %62 = vmatpush.xpose.msra.mxu0 0.0
    %63 = vmatpush.xpose.msra.mxu0 %v46
    %64 = vmatmul.f32.gmra.mxu0 %v43
    %v65 = vpop.f32.mrf.mxu0
    %v66 = vadd.f32 %v39, %v65
    %67 = vdwg.mxu0
    %v68 = vld [vmem:[%s3] sm:$0x1]
    %v70 = vperm.slane %v68, 0
    %v72 = vadd.f32 %v66, %v70
    %v73 = vmul.f32 %v72, 1.442695
    %v74 = vpow.pop %v73
    %vm75 = vcmask 64512
    %76 = vst.msk [vmem:[#allocation5] sm:$0xff] %vm75, %v74
    // Predicated region
    $region22: #{tpu_custom_call.1} parent=1 // pred_check
      _
    $region23: #{tpu_custom_call.1} parent=1 // pred_check_branch
      %78 = sbr.rel (0) target = $region25
    $region24: #{tpu_custom_call.1} parent=1 // pred_region
      %80 = vsyncadd [#allocation4], 0
      %s82 = sshll.u32 [#allocation5], 4
      %s83 = int_to_ptr.vmem [resolvable:$true] %s82
      %s84 = sshll.u32 %s4, 4
      %s85 = int_to_ptr.hbm [resolvable:$true] %s84
      %87 = dma.vmem_to_hbm [thread:$0]  %s83, 128, %s85, [#allocation4]
    $region25: #{tpu_custom_call.1} parent=1 // pred_fallthru
      _
    // Predicated region
    $region26: #{tpu_custom_call.1} parent=1 // pred_check
      _
    $region27: #{tpu_custom_call.1} parent=1 // pred_check_branch
      %89 = sbr.rel (0) target = $region29
    $region28: #{tpu_custom_call.1} parent=1 // pred_region
      %91 = dma.done [#allocation4], 128
    $region29: #{tpu_custom_call.1} parent=1 // pred_fallthru
      _
    %92 = vsyncpa [#allocation3], 1
    %93 = vsyncpa [#allocation4], 1

</llo_original>
